<compile_context>
chip_gen: v7x
topology: tpu7x:2x2x1
jax: 0.10.0
libtpu: 0.0.40
codegen_flags: <defaults>
</compile_context>

<pallas_src>
import math
from functools import partial

import numpy as np
import jax
import jax.numpy as jnp
from jax.experimental import pallas as pl
from jax.experimental.pallas import tpu as pltpu


# ----------------------------- kernels ---------------------------------------

def _layernorm(v, g, b, eps=1e-5):
    v = v.astype(jnp.float32)
    mu = jnp.mean(v, axis=-1, keepdims=True)
    var = jnp.mean(jnp.square(v - mu), axis=-1, keepdims=True)
    return (v - mu) * jax.lax.rsqrt(var + eps) * g + b


def _qkv_kernel(x_ref, ln1g_ref, ln1b_ref, wqkv_ref, bqkv_ref, qkv_ref):
    """ln_1 + c_qkv for one (batch, sequence-tile) block.

    Writes qkv as [1, 3, tq, W] (bf16) with heads de-interleaved
    (q|k|v slabs), so the attention kernel can slice whole-sequence K/V slabs
    with a BlockSpec.
    """
    W = x_ref.shape[2]
    x = x_ref[0]                                                    # [tq, W] f32
    h = _layernorm(x, ln1g_ref[...], ln1b_ref[...]).astype(jnp.bfloat16)
    qkv = jnp.dot(h, wqkv_ref[...],                                 # bf16 x bf16
                  preferred_element_type=jnp.float32) + bqkv_ref[...]
    qkv_ref[0, 0] = qkv[:, 0 * W:1 * W].astype(qkv_ref.dtype)       # q
    qkv_ref[0, 1] = qkv[:, 1 * W:2 * W].astype(qkv_ref.dtype)       # k
    qkv_ref[0, 2] = qkv[:, 2 * W:3 * W].astype(qkv_ref.dtype)       # v


def _attn_mlp_kernel(n_heads, ff_chunk,
                     x_ref, q_ref, k_ref, v_ref,
                     wcp_ref, bcp_ref, ln2g_ref, ln2b_ref,
                     wfc_ref, bfc_ref, wmp_ref, bmp_ref,
                     out_ref):
    """Attention (this q-tile vs full-sequence K/V) + c_proj + residual +
    ln_2 + chunked MLP + residual, fused per (batch, q-tile)."""
    tq, W = x_ref.shape[1], x_ref.shape[2]
    Dh = W // n_heads
    scale = 1.0 / math.sqrt(Dh)           # full scale folded into q only

    x = x_ref[0]                                                    # [tq, W] f32
    q = (q_ref[0, 0].astype(jnp.float32) * scale).astype(jnp.bfloat16)
    k = k_ref[0, 0]                                                 # [T, W] bf16
    v = v_ref[0, 0]                                                 # [T, W] bf16

    # Per-head attention, accumulated straight through c_proj so every MXU
    # output / store stays W lanes wide even when Dh < 128.
    attn_acc = jnp.zeros((tq, W), jnp.float32)
    for h in range(n_heads):                                        # static unroll
        lo, hi = h * Dh, (h + 1) * Dh
        logits = jax.lax.dot_general(
            q[:, lo:hi], k[:, lo:hi], (((1,), (1,)), ((), ())),
            preferred_element_type=jnp.float32)                     # [tq, T] f32
        m = jnp.max(logits, axis=-1, keepdims=True)
        p = jnp.exp(logits - m)
        inv = pl.reciprocal(jnp.sum(p, axis=-1, keepdims=True), approx=True)
        attnw = (p * inv).astype(jnp.bfloat16)                      # softmax
        ctx_h = jnp.dot(attnw, v[:, lo:hi],
                        preferred_element_type=jnp.float32)         # [tq, Dh]
        attn_acc += jnp.dot(ctx_h.astype(jnp.bfloat16), wcp_ref[lo:hi, :],
                            preferred_element_type=jnp.float32)     # [tq, W]
    attn_out = attn_acc + bcp_ref[...]
    x2 = x + attn_out

    # ---- MLP, chunked over the 4W hidden dim (bounds the ff intermediate) ---
    h2 = _layernorm(x2, ln2g_ref[...], ln2b_ref[...]).astype(jnp.bfloat16)
    ff_dim = wfc_ref.shape[1]
    mlp_acc = jnp.zeros((tq, W), jnp.float32)
    for c in range(ff_dim // ff_chunk):                             # static unroll
        lo, hi = c * ff_chunk, (c + 1) * ff_chunk
        ff = jnp.dot(h2, wfc_ref[:, lo:hi],
                     preferred_element_type=jnp.float32) + bfc_ref[:, lo:hi]
        ff = jax.nn.gelu(ff, approximate=False)                     # exact erf GELU
        mlp_acc += jnp.dot(ff.astype(jnp.bfloat16), wmp_ref[lo:hi, :],
                           preferred_element_type=jnp.float32)
    out_ref[0] = (x2 + mlp_acc + bmp_ref[...]).astype(out_ref.dtype)


# ----------------------------- wrapper ---------------------------------------

def _choose_tile(T, max_tile=512):
    """Largest sequence tile <= max_tile that divides T and is sublane-friendly."""
    if T <= max_tile:
        return T
    for cand in range(max_tile, 0, -8):
        if cand % 8 == 0 and T % cand == 0:
            return cand
    return T


def _choose_ff_chunk(F, max_chunk=512):
    """Largest lane-aligned chunk <= max_chunk dividing the FFN hidden dim."""
    if F <= max_chunk:
        return F
    for cand in range(max_chunk, 127, -128):
        if F % cand == 0:
            return cand
    return F


def _resident_spec(shape):
    """Constant-index block (weights/biases): stays VMEM-resident across the
    grid; single-buffered when the jax version supports pipeline_mode (halves
    resident weight VMEM — important on v7x's 64 MiB)."""
    zeros = (0,) * len(shape)
    index_map = lambda b, t: zeros
    try:
        return pl.BlockSpec(shape, index_map, pipeline_mode=pl.Buffered(1))
    except (AttributeError, TypeError):
        return pl.BlockSpec(shape, index_map)


def _estimate_vmem_bytes(B, T, W, tq, ff_chunk):
    """Rough per-call VMEM demand; clamp so the limit is valid on v7x too."""
    bf, f32 = 2, 4
    weights = (W * 3 * W + W * W + W * 4 * W + 4 * W * W) * bf      # single-buffered
    biases = (3 * W + 4 * W + 3 * W + 4 * W) * f32
    acts = 2 * (tq * W * f32                # x tile (double-buffered)
                + tq * W * bf               # q tile
                + 2 * T * W * bf            # full-seq K + V
                + tq * W * f32              # out tile
                + 3 * tq * W * bf)          # pass-1 qkv out tile
    scratch = (tq * ff_chunk + tq * T + 4 * tq * W) * f32 * 2
    total = int((weights + biases + acts + scratch) * 1.5) + (8 << 20)
    return max(16 << 20, min(total, 64 << 20))


def prepare_params(params, n_heads):
    """One-time parameter preparation (do NOT run per forward call):
    permute c_qkv columns from torch's per-head-interleaved layout
    (head h -> [q_h | k_h | v_h]) to [q_all | k_all | v_all], and cast the
    matmul weights to bf16 (they are fp16 in the torch module anyway)."""
    W = params['w_qkv'].shape[0]
    Dh = W // n_heads
    new_idx = np.arange(3 * W)
    j, r = new_idx // W, new_idx % W
    h_, d_ = r // Dh, r % Dh
    perm = (h_ * 3 * Dh + j * Dh + d_).astype(np.int32)
    bf = jnp.bfloat16
    return {
        'ln1_g': params['ln1_g'], 'ln1_b': params['ln1_b'],
        'w_qkv': jnp.asarray(params['w_qkv'][:, perm], dtype=bf),
        'b_qkv': jnp.asarray(params['b_qkv'][:, perm], dtype=jnp.float32),
        'w_cproj': params['w_cproj'].astype(bf),
        'b_cproj': params['b_cproj'],
        'ln2_g': params['ln2_g'], 'ln2_b': params['ln2_b'],
        'w_fc': params['w_fc'].astype(bf), 'b_fc': params['b_fc'],
        'w_mproj': params['w_mproj'].astype(bf), 'b_mproj': params['b_mproj'],
    }


def residual_attention_block(x, params, n_heads, *, max_seq_tile=512):
    """x: [B, T, W] fp32; params: output of prepare_params."""
    B, T, W = x.shape
    tq = _choose_tile(T, max_seq_tile)
    n_t = T // tq
    ff_chunk = _choose_ff_chunk(4 * W)

    cparams = pltpu.CompilerParams(
        dimension_semantics=("parallel", "parallel"),
        vmem_limit_bytes=_estimate_vmem_bytes(B, T, W, tq, ff_chunk))

    # ---- pass 1: ln_1 + c_qkv, tiled over (B, T//tq); qkv stored in bf16 ----
    qkv = pl.pallas_call(
        _qkv_kernel,
        out_shape=jax.ShapeDtypeStruct((B, 3, T, W), jnp.bfloat16),
        grid_spec=pltpu.PrefetchScalarGridSpec(
            num_scalar_prefetch=0,
            grid=(B, n_t),
            in_specs=[
                pl.BlockSpec((1, tq, W), lambda b, t: (b, t, 0)),   # x tile
                _resident_spec((1, W)),                             # ln1_g
                _resident_spec((1, W)),                             # ln1_b
                _resident_spec((W, 3 * W)),                         # w_qkv (bf16)
                _resident_spec((1, 3 * W)),                         # b_qkv
            ],
            out_specs=pl.BlockSpec((1, 3, tq, W), lambda b, t: (b, 0, t, 0)),
        ),
        compiler_params=cparams,
    )(x, params['ln1_g'], params['ln1_b'], params['w_qkv'], params['b_qkv'])

    # ---- pass 2: attention + c_proj + residual + ln_2 + MLP + residual ------
    kernel2 = partial(_attn_mlp_kernel, n_heads, ff_chunk)
    out = pl.pallas_call(
        kernel2,
        out_shape=jax.ShapeDtypeStruct((B, T, W), x.dtype),
        grid_spec=pltpu.PrefetchScalarGridSpec(
            num_scalar_prefetch=0,
            grid=(B, n_t),
            in_specs=[
                pl.BlockSpec((1, tq, W), lambda b, t: (b, t, 0)),        # x tile
                pl.BlockSpec((1, 1, tq, W), lambda b, t: (b, 0, t, 0)),  # q tile
                pl.BlockSpec((1, 1, T, W), lambda b, t: (b, 1, 0, 0)),   # K (full)
                pl.BlockSpec((1, 1, T, W), lambda b, t: (b, 2, 0, 0)),   # V (full)
                _resident_spec((W, W)),                                  # w_cproj
                _resident_spec((1, W)),                                  # b_cproj
                _resident_spec((1, W)),                                  # ln2_g
                _resident_spec((1, W)),                                  # ln2_b
                _resident_spec((W, 4 * W)),                              # w_fc
                _resident_spec((1, 4 * W)),                              # b_fc
                _resident_spec((4 * W, W)),                              # w_mproj
                _resident_spec((1, W)),                                  # b_mproj
            ],
            out_specs=pl.BlockSpec((1, tq, W), lambda b, t: (b, t, 0)),
        ),
        compiler_params=cparams,
    )(x, qkv, qkv, qkv,
      params['w_cproj'], params['b_cproj'],
      params['ln2_g'], params['ln2_b'],
      params['w_fc'], params['b_fc'],
      params['w_mproj'], params['b_mproj'])
    return out


# ----------------------------- params & reference ----------------------------

def init_params(key, width, heads):
    ks = jax.random.split(key, 12)

    def lin_w(k, fi, fo):
        return jax.random.normal(k, (fi, fo), jnp.float32) / math.sqrt(fi)

    def lin_b(k, fo):
        return 0.02 * jax.random.normal(k, (1, fo), jnp.float32)

    p = {}
    p['ln1_g'] = 1.0 + 0.05 * jax.random.normal(ks[0], (1, width), jnp.float32)
    p['ln1_b'] = 0.02 * jax.random.normal(ks[1], (1, width), jnp.float32)
    p['w_qkv'] = lin_w(ks[2], width, 3 * width)    # torch layout (per-head q|k|v)
    p['b_qkv'] = lin_b(ks[3], 3 * width)
    p['w_cproj'] = lin_w(ks[4], width, width)
    p['b_cproj'] = lin_b(ks[5], width)
    p['ln2_g'] = 1.0 + 0.05 * jax.random.normal(ks[6], (1, width), jnp.float32)
    p['ln2_b'] = 0.02 * jax.random.normal(ks[7], (1, width), jnp.float32)
    p['w_fc'] = lin_w(ks[8], width, 4 * width)
    p['b_fc'] = lin_b(ks[9], 4 * width)
    p['w_mproj'] = lin_w(ks[10], 4 * width, width)
    p['b_mproj'] = lin_b(ks[11], width)
    return p


def ref_block(x, p, n_heads):
    """Pure-JAX fp32 reference mirroring the PyTorch forward (standard path)."""
    B, T, W = x.shape
    Dh = W // n_heads

    def ln(v, g, b):
        mu = v.mean(-1, keepdims=True)
        var = ((v - mu) ** 2).mean(-1, keepdims=True)
        return (v - mu) / jnp.sqrt(var + 1e-5) * g[0] + b[0]

    h = ln(x, p['ln1_g'], p['ln1_b'])
    qkv = h @ p['w_qkv'] + p['b_qkv'][0]              # [B, T, 3W] torch ordering
    qkv = qkv.reshape(B, T, n_heads, 3 * Dh)
    q, k, v = qkv[..., :Dh], qkv[..., Dh:2 * Dh], qkv[..., 2 * Dh:]
    scale = 1.0 / math.sqrt(math.sqrt(Dh))
    wgt = jnp.einsum('bthc,bshc->bhts', q * scale, k * scale)
    wgt = jax.nn.softmax(wgt.astype(jnp.float32), axis=-1)
    o = jnp.einsum('bhts,bshc->bthc', wgt, v).reshape(B, T, W)
    o = o @ p['w_cproj'] + p['b_cproj'][0]
    x = x + o
    h2 = ln(x, p['ln2_g'], p['ln2_b'])
    ff = jax.nn.gelu(h2 @ p['w_fc'] + p['b_fc'][0], approximate=False)
    return x + ff @ p['w_mproj'] + p['b_mproj'][0]


# ----------------------------- main -------------------------------------------

if __name__ == "__main__":
    B, T, W, H = 2, 8, 32, 4      # batch, n_ctx, width, heads (head_dim = 8)
    key = jax.random.PRNGKey(0)
    kx, kp = jax.random.split(key)
    x = jax.random.normal(kx, (B, T, W), jnp.float32)
    params = init_params(kp, W, H)
    prepped = prepare_params(params, H)   # one-time: column perm + bf16 cast

    out = residual_attention_block(x, prepped, H)
    out = jax.block_until_ready(out)

    ref = ref_block(x, params, H)
    # Tolerance accommodates bf16 MXU inputs / bf16 qkv intermediate and the
    # approximate EUP reciprocal in the softmax (reference is pure fp32).
    np.testing.assert_allclose(np.asarray(out, dtype=np.float32),
                               np.asarray(ref), rtol=5e-2, atol=5e-2)
    print("KERNEL_OK")
</pallas_src>

<mosaic_0001>
module attributes {stable_mosaic.version = 11 : i64} {
  func.func @_qkv_kernel(%arg0: i32, %arg1: i32, %arg2: memref<1x8x32xf32, #tpu.memory_space<vmem>>, %arg3: memref<1x32xf32, #tpu.memory_space<vmem>>, %arg4: memref<1x32xf32, #tpu.memory_space<vmem>>, %arg5: memref<32x96xbf16, #tpu.memory_space<vmem>>, %arg6: memref<1x96xf32, #tpu.memory_space<vmem>>, %arg7: memref<1x3x8x32xbf16, #tpu.memory_space<vmem>>) attributes {dimension_semantics = [#tpu.dimension_semantics<parallel>, #tpu.dimension_semantics<parallel>], iteration_bounds = array<i64: 2, 1>, scalar_prefetch = 0 : i64, scratch_operands = 0 : i64, tpu.core_type = #tpu.core_type<tc>, window_params = [{transform_indices = @transform_0, window_bounds = array<i64: 1, 8, 32>}, {pipeline_mode = #tpu.pipeline_mode<synchronous>, transform_indices = @transform_1, window_bounds = array<i64: 1, 32>}, {pipeline_mode = #tpu.pipeline_mode<synchronous>, transform_indices = @transform_2, window_bounds = array<i64: 1, 32>}, {pipeline_mode = #tpu.pipeline_mode<synchronous>, transform_indices = @transform_3, window_bounds = array<i64: 32, 96>}, {pipeline_mode = #tpu.pipeline_mode<synchronous>, transform_indices = @transform_4, window_bounds = array<i64: 1, 96>}, {transform_indices = @transform_5, window_bounds = array<i64: 1, 3, 8, 32>}]} {
    %c0 = arith.constant 0 : index
    %c0_0 = arith.constant 0 : index
    %c0_1 = arith.constant 0 : index
    %0 = vector.load %arg2[%c0, %c0_0, %c0_1] : memref<1x8x32xf32, #tpu.memory_space<vmem>>, vector<1x8x32xf32>
    %1 = vector.shape_cast %0 : vector<1x8x32xf32> to vector<8x32xf32>
    %c0_2 = arith.constant 0 : index
    %c0_3 = arith.constant 0 : index
    %2 = vector.load %arg3[%c0_2, %c0_3] : memref<1x32xf32, #tpu.memory_space<vmem>>, vector<1x32xf32>
    %c0_4 = arith.constant 0 : index
    %c0_5 = arith.constant 0 : index
    %3 = vector.load %arg4[%c0_4, %c0_5] : memref<1x32xf32, #tpu.memory_space<vmem>>, vector<1x32xf32>
    %cst = arith.constant dense<0.000000e+00> : vector<8xf32>
    %4 = vector.multi_reduction <add>, %1, %cst [1] : vector<8x32xf32> to vector<8xf32>
    %5 = vector.shape_cast %4 : vector<8xf32> to vector<8x1xf32>
    %cst_6 = arith.constant 3.200000e+01 : f32
    %6 = vector.broadcast %cst_6 : f32 to vector<8x1xf32>
    %7 = arith.divf %5, %6 : vector<8x1xf32>
    %8 = vector.broadcast %7 : vector<8x1xf32> to vector<8x32xf32>
    %9 = arith.subf %1, %8 : vector<8x32xf32>
    %10 = arith.mulf %9, %9 : vector<8x32xf32>
    %cst_7 = arith.constant dense<0.000000e+00> : vector<8xf32>
    %11 = vector.multi_reduction <add>, %10, %cst_7 [1] : vector<8x32xf32> to vector<8xf32>
    %12 = vector.shape_cast %11 : vector<8xf32> to vector<8x1xf32>
    %cst_8 = arith.constant 3.200000e+01 : f32
    %13 = vector.broadcast %cst_8 : f32 to vector<8x1xf32>
    %14 = arith.divf %12, %13 : vector<8x1xf32>
    %15 = vector.broadcast %7 : vector<8x1xf32> to vector<8x32xf32>
    %16 = arith.subf %1, %15 : vector<8x32xf32>
    %cst_9 = arith.constant 9.99999974E-6 : f32
    %17 = vector.broadcast %cst_9 : f32 to vector<8x1xf32>
    %18 = arith.addf %14, %17 : vector<8x1xf32>
    %19 = math.rsqrt %18 : vector<8x1xf32>
    %20 = vector.broadcast %19 : vector<8x1xf32> to vector<8x32xf32>
    %21 = arith.mulf %16, %20 : vector<8x32xf32>
    %22 = vector.broadcast %2 : vector<1x32xf32> to vector<8x32xf32>
    %23 = arith.mulf %21, %22 : vector<8x32xf32>
    %24 = vector.broadcast %3 : vector<1x32xf32> to vector<8x32xf32>
    %25 = arith.addf %23, %24 : vector<8x32xf32>
    %26 = arith.truncf %25 : vector<8x32xf32> to vector<8x32xbf16>
    %c0_10 = arith.constant 0 : index
    %c0_11 = arith.constant 0 : index
    %27 = vector.load %arg5[%c0_10, %c0_11] : memref<32x96xbf16, #tpu.memory_space<vmem>>, vector<32x96xbf16>
    %cst_12 = arith.constant dense<0.000000e+00> : vector<8x96xf32>
    %28 = tpu.matmul %26, %27, %cst_12 {dimension_numbers = #tpu.dot_dimension_numbers<[1], [0], [0], [1], [0, 0, 1, 1], [], []>} : vector<8x32xbf16>, vector<32x96xbf16>, vector<8x96xf32> -> vector<8x96xf32>
    %c0_13 = arith.constant 0 : index
    %c0_14 = arith.constant 0 : index
    %29 = vector.load %arg6[%c0_13, %c0_14] : memref<1x96xf32, #tpu.memory_space<vmem>>, vector<1x96xf32>
    %30 = vector.broadcast %29 : vector<1x96xf32> to vector<8x96xf32>
    %31 = arith.addf %28, %30 : vector<8x96xf32>
    %32 = vector.extract_strided_slice %31 {offsets = [0, 0], sizes = [8, 32], strides = [1, 1]} : vector<8x96xf32> to vector<8x32xf32>
    %33 = arith.truncf %32 : vector<8x32xf32> to vector<8x32xbf16>
    %c0_15 = arith.constant 0 : index
    %c0_16 = arith.constant 0 : index
    %c0_17 = arith.constant 0 : index
    %c0_18 = arith.constant 0 : index
    %34 = vector.load %arg7[%c0_15, %c0_16, %c0_17, %c0_18] : memref<1x3x8x32xbf16, #tpu.memory_space<vmem>>, vector<1x1x8x32xbf16>
    %35 = vector.shape_cast %34 : vector<1x1x8x32xbf16> to vector<8x32xbf16>
    %36 = vector.shape_cast %33 : vector<8x32xbf16> to vector<1x1x8x32xbf16>
    tpu.vector_store %arg7[%c0_15, %c0_16, %c0_17, %c0_18], %36 {strides = array<i32>} : memref<1x3x8x32xbf16, #tpu.memory_space<vmem>>, vector<1x1x8x32xbf16>,
    %37 = vector.extract_strided_slice %31 {offsets = [0, 32], sizes = [8, 32], strides = [1, 1]} : vector<8x96xf32> to vector<8x32xf32>
    %38 = arith.truncf %37 : vector<8x32xf32> to vector<8x32xbf16>
    %c0_19 = arith.constant 0 : index
    %c1 = arith.constant 1 : index
    %c0_20 = arith.constant 0 : index
    %c0_21 = arith.constant 0 : index
    %39 = vector.load %arg7[%c0_19, %c1, %c0_20, %c0_21] : memref<1x3x8x32xbf16, #tpu.memory_space<vmem>>, vector<1x1x8x32xbf16>
    %40 = vector.shape_cast %39 : vector<1x1x8x32xbf16> to vector<8x32xbf16>
    %41 = vector.shape_cast %38 : vector<8x32xbf16> to vector<1x1x8x32xbf16>
    tpu.vector_store %arg7[%c0_19, %c1, %c0_20, %c0_21], %41 {strides = array<i32>} : memref<1x3x8x32xbf16, #tpu.memory_space<vmem>>, vector<1x1x8x32xbf16>,
    %42 = vector.extract_strided_slice %31 {offsets = [0, 64], sizes = [8, 32], strides = [1, 1]} : vector<8x96xf32> to vector<8x32xf32>
    %43 = arith.truncf %42 : vector<8x32xf32> to vector<8x32xbf16>
    %c0_22 = arith.constant 0 : index
    %c2 = arith.constant 2 : index
    %c0_23 = arith.constant 0 : index
    %c0_24 = arith.constant 0 : index
    %44 = vector.load %arg7[%c0_22, %c2, %c0_23, %c0_24] : memref<1x3x8x32xbf16, #tpu.memory_space<vmem>>, vector<1x1x8x32xbf16>
    %45 = vector.shape_cast %44 : vector<1x1x8x32xbf16> to vector<8x32xbf16>
    %46 = vector.shape_cast %43 : vector<8x32xbf16> to vector<1x1x8x32xbf16>
    tpu.vector_store %arg7[%c0_22, %c2, %c0_23, %c0_24], %46 {strides = array<i32>} : memref<1x3x8x32xbf16, #tpu.memory_space<vmem>>, vector<1x1x8x32xbf16>,
    return
  }
  func.func @transform_0(%arg0: i32, %arg1: i32) -> (i32, i32, i32) {
    %c0_i32 = arith.constant 0 : i32
    %c0_i32_0 = arith.constant 0 : i32
    return %arg0, %arg1, %c0_i32 : i32, i32, i32
  }
  func.func @transform_1(%arg0: i32, %arg1: i32) -> (i32, i32) {
    %c0_i32 = arith.constant 0 : i32
    %c0_i32_0 = arith.constant 0 : i32
    %c0_i32_1 = arith.constant 0 : i32
    return %c0_i32, %c0_i32_0 : i32, i32
  }
  func.func @transform_2(%arg0: i32, %arg1: i32) -> (i32, i32) {
    %c0_i32 = arith.constant 0 : i32
    %c0_i32_0 = arith.constant 0 : i32
    %c0_i32_1 = arith.constant 0 : i32
    return %c0_i32, %c0_i32_0 : i32, i32
  }
  func.func @transform_3(%arg0: i32, %arg1: i32) -> (i32, i32) {
    %c0_i32 = arith.constant 0 : i32
    %c0_i32_0 = arith.constant 0 : i32
    %c0_i32_1 = arith.constant 0 : i32
    return %c0_i32, %c0_i32_0 : i32, i32
  }
  func.func @transform_4(%arg0: i32, %arg1: i32) -> (i32, i32) {
    %c0_i32 = arith.constant 0 : i32
    %c0_i32_0 = arith.constant 0 : i32
    %c0_i32_1 = arith.constant 0 : i32
    return %c0_i32, %c0_i32_0 : i32, i32
  }
  func.func @transform_5(%arg0: i32, %arg1: i32) -> (i32, i32, i32, i32) {
    %c0_i32 = arith.constant 0 : i32
    %c0_i32_0 = arith.constant 0 : i32
    %c0_i32_1 = arith.constant 0 : i32
    return %arg0, %c0_i32, %arg1, %c0_i32_0 : i32, i32, i32, i32
  }
}

</mosaic_0001>

<llo_original>
// kernel: tpu_custom_call.1
$region0: #{tpu_custom_call.1}
  #allocation0 [shape = 'u32[]', space=smem, size = 0x4, offset = 0x4, fixed_abs, tag = 'smem constant byte address 0x4 - core index']
  #allocation1 [shape = 'u32[144,128]{1,0:T(1,128)}', space=vmem, size = 0x12000, scoped, tag = 'internal scratch']
  %s0 = inlined_call_operand.hbm [shape: f32[2,8,32], index: 0, kind: input, shape index: {}]
  %s1 = inlined_call_operand.vmem [shape: f32[1,32], index: 1, kind: input, shape index: {}]
  %s2 = inlined_call_operand.vmem [shape: f32[1,32], index: 2, kind: input, shape index: {}]
  %s3 = inlined_call_operand.hbm [shape: bf16[32,96], index: 3, kind: input, shape index: {}]
  %s4 = inlined_call_operand.vmem [shape: f32[1,96], index: 4, kind: input, shape index: {}]
  %s5 = inlined_call_operand.hbm [shape: bf16[2,3,8,32], index: 5, kind: output, shape index: {}]
  %s6 = sld [smem:[#allocation0]]
  $region61: #{tpu_custom_call.1} parent=0
    _
  %s8 = ssub.s32 1, %s6
  %s9 = scalar_select 0, %s8, %s6
  $region1: #{tpu_custom_call.1} parent=0
    #allocation2 [shape = 'u8[8192]{0}', space=vmem, size = 0x2000, scoped, tag = 'input window, operand 0']
    #allocation3 [shape = 's32[2]{0}', space=sflag, size = 0x8, scoped, tag = 'scoped memory for tpu_custom_call.1']
    #allocation4 [shape = 's32[2]{0}', space=sflag, size = 0x8, scoped, tag = 'scoped memory for tpu_custom_call.1']
    #allocation5 [shape = 'u8[8192]{0}', space=vmem, size = 0x2000, scoped, tag = 'input window, operand 3, single buffered']
    #allocation6 [shape = 's32[1]{0}', space=sflag, size = 0x4, scoped, tag = 'scoped memory for tpu_custom_call.1']
    #allocation7 [shape = 'u8[12288]{0}', space=vmem, size = 0x3000, scoped, tag = 'output window, operand 0']
    %10 = vsyncpa [#allocation3], 0
    %s11 = scalar_lea.sflag [#allocation3], 1
    %12 = vsyncpa %s11, 0
    %13 = vsyncpa [#allocation6], 0
    %14 = vsyncpa [#allocation4], 0
    %s15 = scalar_lea.sflag [#allocation4], 1
    %16 = vsyncpa %s15, 0
    loop: start=0, step=1, limit=4
    $region2: #{tpu_custom_call.1} parent=1 // loop_pre_header
      _
    $region3: #{tpu_custom_call.1} parent=1 // loop_header
      %s18 = sphi 0, %s22
      %p19 = scmp.ge.s32.totalorder %s18, 4
      %s25 = sphi 0, %s37
      %s26 = sphi 0, %s33
      %s27 = sphi 0, %s25
      %s28 = sphi 0, %s26
      %s29 = sphi 0, %s27
      %s30 = sphi 0, %s28
      %s42 = sphi 0, %s44
      %s45 = sphi 0, %s42
      %s46 = sphi 0, %s45
      %s62 = sphi 0, %s46
      %s66 = sphi 0, %s66
      %s68 = sphi 0, %s66
      %s69 = sphi 0, %s68
      %s83 = sphi 0, %s69
      %s87 = sphi 0, %s87
      %s89 = sphi 0, %s87
      %s90 = sphi 0, %s89
      %s104 = sphi 0, %s90
      %s108 = sphi 0, %s108
      %s110 = sphi 0, %s108
      %s111 = sphi 0, %s110
      %s125 = sphi 0, %s111
      %s129 = sphi 0, %s129
      %s131 = sphi 0, %s129
      %s132 = sphi 0, %s131
      %s146 = sphi 0, %s132
      %s154 = sphi 0, %s156
      %s157 = sphi 0, %s154
      %s158 = sphi 0, %s157
      %s174 = sphi 0, %s158
    $region4: #{tpu_custom_call.1} parent=1 // loop_header_branch
      %21 = sbr.rel (%p19) target = $region8
    $region5: #{tpu_custom_call.1} parent=1 // loop_body
      %s23 = ssub.s32 %s18, 1
      %s24 = ssub.s32 %s18, 2
      %s31 = sadd.s32 1, %s26
      %p32 = scmp.ge.s32.totalorder %s31, 1
      %s33 = scalar_select %p32, 0, %s31
      %s34 = sadd.s32 1, %s25
      %s35 = scalar_select %p32, %s34, %s25
      %p36 = scmp.ge.s32.totalorder %s35, 2
      %s37 = scalar_select %p36, 0, %s35
      %s38 = ssub.s32 %s25, %s37
      %s39 = ssub.s32 %s26, %s33
      %s40 = sor.u32 %s38, %s39
      %p41 = scmp.eq.s32.totalorder %s40, 0
      %s43 = sadd.s32 %s42, 1
      %s44 = scalar_select %p41, %s42, %s43
      %p47 = pneg %p41
      %p48 = scmp.eq.s32.totalorder %s18, 1
      %p49 = por %p47, %p48
      %p50 = scmp.ne.s32.totalorder %s42, %s45
      %p51 = scmp.eq.s32.totalorder %s18, 0
      %p52 = por %p50, %p51
      %p53 = scmp.ne.s32.totalorder %s42, %s45
      %p54 = scmp.eq.s32.totalorder %s23, 1
      %p55 = por %p53, %p54
      %p56 = scmp.ne.s32.totalorder %s45, %s46
      %p57 = scmp.eq.s32.totalorder %s23, 0
      %p58 = por %p56, %p57
      %p59 = scmp.ne.s32.totalorder %s45, %s46
      %p60 = scmp.eq.s32.totalorder %s24, 1
      %p61 = por %p59, %p60
      %p63 = scmp.ne.s32.totalorder %s46, %s62
      %p64 = scmp.eq.s32.totalorder %s24, 0
      %p65 = por %p63, %p64
      %s67 = sadd.s32 %s66, 1
      %p70 = scmp.eq.s32.totalorder %s18, 1
      %p71 = scmp.ne.s32.totalorder %s66, %s68
      %p72 = scmp.eq.s32.totalorder %s18, 0
      %p73 = por %p71, %p72
      %p74 = scmp.ne.s32.totalorder %s66, %s68
      %p75 = scmp.eq.s32.totalorder %s23, 1
      %p76 = por %p74, %p75
      %p77 = scmp.ne.s32.totalorder %s68, %s69
      %p78 = scmp.eq.s32.totalorder %s23, 0
      %p79 = por %p77, %p78
      %p80 = scmp.ne.s32.totalorder %s68, %s69
      %p81 = scmp.eq.s32.totalorder %s24, 1
      %p82 = por %p80, %p81
      %p84 = scmp.ne.s32.totalorder %s69, %s83
      %p85 = scmp.eq.s32.totalorder %s24, 0
      %p86 = por %p84, %p85
      %s88 = sadd.s32 %s87, 1
      %p91 = scmp.eq.s32.totalorder %s18, 1
      %p92 = scmp.ne.s32.totalorder %s87, %s89
      %p93 = scmp.eq.s32.totalorder %s18, 0
      %p94 = por %p92, %p93
      %p95 = scmp.ne.s32.totalorder %s87, %s89
      %p96 = scmp.eq.s32.totalorder %s23, 1
      %p97 = por %p95, %p96
      %p98 = scmp.ne.s32.totalorder %s89, %s90
      %p99 = scmp.eq.s32.totalorder %s23, 0
      %p100 = por %p98, %p99
      %p101 = scmp.ne.s32.totalorder %s89, %s90
      %p102 = scmp.eq.s32.totalorder %s24, 1
      %p103 = por %p101, %p102
      %p105 = scmp.ne.s32.totalorder %s90, %s104
      %p106 = scmp.eq.s32.totalorder %s24, 0
      %p107 = por %p105, %p106
      %s109 = sadd.s32 %s108, 1
      %p112 = scmp.eq.s32.totalorder %s18, 1
      %p113 = scmp.ne.s32.totalorder %s108, %s110
      %p114 = scmp.eq.s32.totalorder %s18, 0
      %p115 = por %p113, %p114
      %p116 = scmp.ne.s32.totalorder %s108, %s110
      %p117 = scmp.eq.s32.totalorder %s23, 1
      %p118 = por %p116, %p117
      %p119 = scmp.ne.s32.totalorder %s110, %s111
      %p120 = scmp.eq.s32.totalorder %s23, 0
      %p121 = por %p119, %p120
      %p122 = scmp.ne.s32.totalorder %s110, %s111
      %p123 = scmp.eq.s32.totalorder %s24, 1
      %p124 = por %p122, %p123
      %p126 = scmp.ne.s32.totalorder %s111, %s125
      %p127 = scmp.eq.s32.totalorder %s24, 0
      %p128 = por %p126, %p127
      %s130 = sadd.s32 %s129, 1
      %p133 = scmp.eq.s32.totalorder %s18, 1
      %p134 = scmp.ne.s32.totalorder %s129, %s131
      %p135 = scmp.eq.s32.totalorder %s18, 0
      %p136 = por %p134, %p135
      %p137 = scmp.ne.s32.totalorder %s129, %s131
      %p138 = scmp.eq.s32.totalorder %s23, 1
      %p139 = por %p137, %p138
      %p140 = scmp.ne.s32.totalorder %s131, %s132
      %p141 = scmp.eq.s32.totalorder %s23, 0
      %p142 = por %p140, %p141
      %p143 = scmp.ne.s32.totalorder %s131, %s132
      %p144 = scmp.eq.s32.totalorder %s24, 1
      %p145 = por %p143, %p144
      %p147 = scmp.ne.s32.totalorder %s132, %s146
      %p148 = scmp.eq.s32.totalorder %s24, 0
      %p149 = por %p147, %p148
      %s150 = ssub.s32 %s25, %s37
      %s151 = ssub.s32 %s26, %s33
      %s152 = sor.u32 %s150, %s151
      %p153 = scmp.eq.s32.totalorder %s152, 0
      %s155 = sadd.s32 %s154, 1
      %s156 = scalar_select %p153, %s154, %s155
      %p159 = pneg %p153
      %p160 = scmp.eq.s32.totalorder %s18, 1
      %p161 = por %p159, %p160
      %p162 = scmp.ne.s32.totalorder %s154, %s157
      %p163 = scmp.eq.s32.totalorder %s18, 0
      %p164 = por %p162, %p163
      %p165 = scmp.ne.s32.totalorder %s154, %s157
      %p166 = scmp.eq.s32.totalorder %s23, 1
      %p167 = por %p165, %p166
      %p168 = scmp.ne.s32.totalorder %s157, %s158
      %p169 = scmp.eq.s32.totalorder %s23, 0
      %p170 = por %p168, %p169
      %p171 = scmp.ne.s32.totalorder %s157, %s158
      %p172 = scmp.eq.s32.totalorder %s24, 1
      %p173 = por %p171, %p172
      %p175 = scmp.ne.s32.totalorder %s158, %s174
      %p176 = scmp.eq.s32.totalorder %s24, 0
      %p177 = por %p175, %p176
      %p178 = scmp.le.s32.totalorder 1, %s18
      %p179 = scmp.lt.s32.totalorder %s18, 3
      %p180 = pnand %p178, %p179
      %p181 = pneg %p180
      // Predicated region
      $region9: #{tpu_custom_call.1} parent=5 // pred_check
        _
      $region10: #{tpu_custom_call.1} parent=5 // pred_check_branch
        %183 = sbr.rel (%p180) target = $region12
      $region11: #{tpu_custom_call.1} parent=5 // pred_region
        %s184 = ssub.s32 %s18, 1
        // Predicated region
        $region13: #{tpu_custom_call.1} parent=11 // pred_check
          %p185 = pneg %p79
        $region14: #{tpu_custom_call.1} parent=11 // pred_check_branch
          %187 = sbr.rel (%p185) target = $region16
        $region15: #{tpu_custom_call.1} parent=11 // pred_region
          _
        $region16: #{tpu_custom_call.1} parent=11 // pred_fallthru
          _
        // Predicated region
        $region17: #{tpu_custom_call.1} parent=11 // pred_check
          %p188 = pneg %p100
        $region18: #{tpu_custom_call.1} parent=11 // pred_check_branch
          %190 = sbr.rel (%p188) target = $region20
        $region19: #{tpu_custom_call.1} parent=11 // pred_region
          _
        $region20: #{tpu_custom_call.1} parent=11 // pred_fallthru
          _
        // Predicated region
        $region21: #{tpu_custom_call.1} parent=11 // pred_check
          %p191 = pneg %p121
        $region22: #{tpu_custom_call.1} parent=11 // pred_check_branch
          %193 = sbr.rel (%p191) target = $region24
        $region23: #{tpu_custom_call.1} parent=11 // pred_region
          %s195 = ssub.s32 256, 256
          %196 = vsyncadd [#allocation6], %s195
          %s197 = sshll.u32 [#allocation5], 4
          %s198 = int_to_ptr.vmem [resolvable:$true] %s197
          %203 = dma.hbm_to_vmem [thread:$0]  %s3, 256, %s198, [#allocation6], 64, 64, 4
        $region24: #{tpu_custom_call.1} parent=11 // pred_fallthru
          _
        // Predicated region
        $region25: #{tpu_custom_call.1} parent=11 // pred_check
          %p204 = pneg %p142
        $region26: #{tpu_custom_call.1} parent=11 // pred_check_branch
          %206 = sbr.rel (%p204) target = $region28
        $region27: #{tpu_custom_call.1} parent=11 // pred_region
          _
        $region28: #{tpu_custom_call.1} parent=11 // pred_fallthru
          _
      $region12: #{tpu_custom_call.1} parent=5 // pred_fallthru
        _
      %p207 = scmp.lt.s32.totalorder %s18, 2
      // Predicated region
      $region29: #{tpu_custom_call.1} parent=5 // pred_check
        %p208 = pneg %p207
      $region30: #{tpu_custom_call.1} parent=5 // pred_check_branch
        %210 = sbr.rel (%p208) target = $region32
      $region31: #{tpu_custom_call.1} parent=5 // pred_region
        // Predicated region
        $region33: #{tpu_custom_call.1} parent=31 // pred_check
          %p211 = pneg %p52
        $region34: #{tpu_custom_call.1} parent=31 // pred_check_branch
          %213 = sbr.rel (%p211) target = $region36
        $region35: #{tpu_custom_call.1} parent=31 // pred_region
          %s214 = sand.u32 %s42, 1
          %s215 = scalar_lea.sflag [#allocation3], %s214
          %s216 = sand.u32 %s42, 1
          %s217 = smul.addr %s216, 8
          %s218 = scalar_lea.vmem [#allocation2], %s217
          %s220 = ssub.s32 128, 128
          %221 = vsyncadd %s215, %s220
          %s222 = sadd.s32 %s26, %s25
          %s223 = smul.addr %s222, 128
          %s224 = scalar_lea.hbm %s0, %s223
          %s226 = sshll.u32 %s218, 4
          %s227 = int_to_ptr.vmem [resolvable:$true] %s226
          %229 = dma.hbm_to_vmem [thread:$0]  %s224, 128, %s227, %s215
        $region36: #{tpu_custom_call.1} parent=31 // pred_fallthru
          _
      $region32: #{tpu_custom_call.1} parent=5 // pred_fallthru
        _
      %p230 = scmp.le.s32.totalorder 1, %s18
      %p231 = scmp.lt.s32.totalorder %s18, 3
      %p232 = pnand %p230, %p231
      %p233 = pneg %p232
      // Predicated region
      $region37: #{tpu_custom_call.1} parent=5 // pred_check
        _
      $region38: #{tpu_custom_call.1} parent=5 // pred_check_branch
        %235 = sbr.rel (%p232) target = $region40
      $region39: #{tpu_custom_call.1} parent=5 // pred_region
        %s236 = ssub.s32 %s18, 1
        %s237 = sand.u32 %s45, 1
        %s238 = scalar_lea.sflag [#allocation3], %s237
        %s239 = sand.u32 %s45, 1
        %s240 = smul.addr %s239, 8
        %s241 = scalar_lea.vmem [#allocation2], %s240
        // Predicated region
        $region41: #{tpu_custom_call.1} parent=39 // pred_check
          %p242 = pneg %p58
        $region42: #{tpu_custom_call.1} parent=39 // pred_check_branch
          %244 = sbr.rel (%p242) target = $region44
        $region43: #{tpu_custom_call.1} parent=39 // pred_region
          %245 = dma.done %s238, 128
        $region44: #{tpu_custom_call.1} parent=39 // pred_fallthru
          _
        // Predicated region
        $region45: #{tpu_custom_call.1} parent=39 // pred_check
          %p246 = pneg %p121
        $region46: #{tpu_custom_call.1} parent=39 // pred_check_branch
          %248 = sbr.rel (%p246) target = $region48
        $region47: #{tpu_custom_call.1} parent=39 // pred_region
          %249 = dma.done [#allocation6], 256
        $region48: #{tpu_custom_call.1} parent=39 // pred_fallthru
          _
        %s250 = sand.u32 %s45, 1
        %s251 = scalar_lea.sflag [#allocation3], %s250
        %s252 = sand.u32 %s45, 1
        %s253 = smul.addr %s252, 8
        %s254 = scalar_lea.vmem [#allocation2], %s253
        %p255 = pneg %p58
        %p256 = pneg %p55
        %p257 = pneg %p79
        %p258 = pneg %p76
        %p259 = pneg %p100
        %p260 = pneg %p97
        %p261 = pneg %p121
        %p262 = pneg %p118
        %p263 = pneg %p142
        %p264 = pneg %p139
        %p265 = pneg %p170
        %p266 = pneg %p167
        %s267 = sand.u32 %s157, 1
        %s268 = scalar_lea.sflag [#allocation4], %s267
        %s269 = sand.u32 %s157, 1
        %s270 = smul.addr %s269, 12
        %s271 = scalar_lea.vmem [#allocation7], %s270
        %v273 = vld [vmem:[%s241] sm:$0xff]
        %v274 = vld [vmem:[%s1] sm:$0x1]
        %v275 = vld [vmem:[%s2] sm:$0x1]
        %vm276 = vcmask 261120
        %v277 = vsel %vm276, %v273, 0.0
        %278 = vadd.xlane.f32.xlu0 %v277
        %v279 = vpop.xlane.xlu0 %278
        %v280 = vrcp.pop 32.0
        %v281 = vmul.f32 %v279, %v280
        %v282 = vsub.f32 %v273, %v281
        %v283 = vmul.f32 %v282, %v282
        %v284 = vsel %vm276, %v283, 0.0
        %285 = vadd.xlane.f32.xlu0 %v284
        %v286 = vpop.xlane.xlu0 %285
        %v287 = vmul.f32 %v286, %v280
        %v288 = vadd.f32 %v287, 1e-05
        %v289 = vrsqrt.pop %v288
        %v290 = vmul.f32 %v282, %v289
        %v292 = vlaneseq
        %v293 = vshrl.u32 %v292, 7
        %v294 = vsub.s32 0, %v293
        %v295 = vrot.slane %v274, %v294
        %v297 = vmul.f32 %v290, %v295
        %v299 = vlaneseq
        %v300 = vshrl.u32 %v299, 7
        %v301 = vsub.s32 0, %v300
        %v302 = vrot.slane %v275, %v301
        %v304 = vadd.f32 %v297, %v302
        %v305 = vpack.c.bf16 %v304, %v304
        %v306 = vld [vmem:[#allocation5] sm:$0xf]
        %v307 = vld [vmem:[#allocation5 + $0x4] sm:$0xf]
        %v308 = vld [vmem:[#allocation5 + $0x8] sm:$0xf]
        %v309 = vld [vmem:[#allocation5 + $0xc] sm:$0xf]
        %v310 = vld [vmem:[%s4] sm:$0x1]
        %v312 = vlaneseq
        %v313 = vshrl.u32 %v312, 7
        %v314 = vsub.s32 0, %v313
        %v315 = vrot.slane %v310, %v314
        %v321 = vunpack.c.l.b16 %v306
        %v322 = vunpack.c.l.b16 %v307
        %v323 = vunpack.c.l.b16 %v308
        %v324 = vunpack.c.l.b16 %v309
        %v325 = vpack.c.b16 %v322, %v321
        %v326 = vpack.c.b16 %v324, %v323
        %v330 = vsel %vm276, %v305, 0
        %332 = vmatprep.subr.bf16.mxu0 0
        %333 = vmatpush1.bf16.msra.mxu0 %v325
        %334 = vmatprep.subr.bf16.mxu0 0
        %335 = vmatpush1.bf16.msra.mxu0 %v326
        %336 = vmatprep.subr.bf16.mxu0 0
        %337 = vmatpush1.bf16.msra.mxu0 0
        %338 = vmatprep.subr.bf16.mxu0 0
        %339 = vmatpush1.bf16.msra.mxu0 0
        %340 = vmatprep.subr.bf16.mxu0 0
        %341 = vmatpush1.bf16.msra.mxu0 0
        %342 = vmatprep.subr.bf16.mxu0 0
        %343 = vmatpush1.bf16.msra.mxu0 0
        %344 = vmatprep.subr.bf16.mxu0 0
        %345 = vmatpush1.bf16.msra.mxu0 0
        %346 = vmatprep.subr.bf16.mxu0 0
        %347 = vmatpush1.bf16.msra.mxu0 0
        %348 = vmatprep.subr.bf16.mxu0 0
        %349 = vmatpush1.bf16.msra.mxu0 0
        %350 = vmatprep.subr.bf16.mxu0 0
        %351 = vmatpush1.bf16.msra.mxu0 0
        %352 = vmatprep.subr.bf16.mxu0 0
        %353 = vmatpush1.bf16.msra.mxu0 0
        %354 = vmatprep.subr.bf16.mxu0 0
        %355 = vmatpush1.bf16.msra.mxu0 0
        %356 = vmatprep.subr.bf16.mxu0 0
        %357 = vmatpush1.bf16.msra.mxu0 0
        %358 = vmatprep.subr.bf16.mxu0 0
        %359 = vmatpush1.bf16.msra.mxu0 0
        %360 = vmatprep.subr.bf16.mxu0 0
        %361 = vmatpush1.bf16.msra.mxu0 0
        %362 = vmatprep.subr.bf16.mxu0 0
        %363 = vmatpush1.bf16.msra.mxu0 0
        %364 = vmatprep.mubr.bf16.mxu0 0
        %365 = vmatmul.mubr.bf16.gmra.mrb[0].mxu0 %v330
        %v366 = vpop.f32.mrb[0].mxu0
        %v367 = vadd.f32 %v315, %v366
        %v368 = vpop.f32.mrb[0].mxu0
        %v369 = vpop.f32.mrb[0].mxu0
        %v370 = vpop.f32.mrb[0].mxu0
        %371 = vdwg.mxu0
        %v372 = vpack.c.bf16 %v367, %v367
        %vm373 = vcmask 257024
        %374 = vst.msk [vmem:[%s271] sm:$0xf] %vm373, %v372
        %v376 = vunpack.c.l.b16 %v372
        %v377 = vpack.c.b16 %v376, %v376
        %378 = vrot.lane.b32.xlu0 %v377, 96
        %v379 = vpop.permute.xlu0 %378
        %s381 = scalar_lea.vmem %s271, 4 [#allocation7]
        %382 = vst.msk [vmem:[%s381] sm:$0xf] %vm373, %v379
        %383 = vrot.lane.b32.xlu0 %v377, 64
        %v384 = vpop.permute.xlu0 %383
        %s386 = scalar_lea.vmem %s271, 8 [#allocation7]
        %387 = vst.msk [vmem:[%s386] sm:$0xf] %vm373, %v384
        %s388 = sand.u32 %s157, 1
        %s389 = scalar_lea.sflag [#allocation4], %s388
        %s390 = sand.u32 %s157, 1
        %s391 = smul.addr %s390, 12
        %s392 = scalar_lea.vmem [#allocation7], %s391
        // Predicated region
        $region49: #{tpu_custom_call.1} parent=39 // pred_check
          %p393 = pneg %p167
        $region50: #{tpu_custom_call.1} parent=39 // pred_check_branch
          %395 = sbr.rel (%p393) target = $region52
        $region51: #{tpu_custom_call.1} parent=39 // pred_region
          %s397 = ssub.s32 192, 192
          %398 = vsyncadd %s389, %s397
          %s399 = smul.addr %s27, 3
          %s400 = sadd.s32 %s28, %s399
          %s401 = smul.addr %s400, 64
          %s402 = scalar_lea.hbm %s5, %s401
          %s403 = sshll.u32 %s392, 4
          %s404 = int_to_ptr.vmem [resolvable:$true] %s403
          %409 = dma.vmem_to_hbm [thread:$0]  %s404, 192, %s402, %s389, 64, 64, 4
        $region52: #{tpu_custom_call.1} parent=39 // pred_fallthru
          _
      $region40: #{tpu_custom_call.1} parent=5 // pred_fallthru
        _
      %p410 = scmp.le.s32.totalorder 2, %s18
      // Predicated region
      $region53: #{tpu_custom_call.1} parent=5 // pred_check
        %p411 = pneg %p410
      $region54: #{tpu_custom_call.1} parent=5 // pred_check_branch
        %413 = sbr.rel (%p411) target = $region56
      $region55: #{tpu_custom_call.1} parent=5 // pred_region
        %s414 = ssub.s32 %s18, 2
        // Predicated region
        $region57: #{tpu_custom_call.1} parent=55 // pred_check
          %p415 = pneg %p173
        $region58: #{tpu_custom_call.1} parent=55 // pred_check_branch
          %417 = sbr.rel (%p415) target = $region60
        $region59: #{tpu_custom_call.1} parent=55 // pred_region
          %s418 = sand.u32 %s158, 1
          %s419 = scalar_lea.sflag [#allocation4], %s418
          %s420 = sand.u32 %s158, 1
          %s421 = smul.addr %s420, 12
          %s422 = scalar_lea.vmem [#allocation7], %s421
          %423 = dma.done %s419, 192
        $region60: #{tpu_custom_call.1} parent=55 // pred_fallthru
          _
      $region56: #{tpu_custom_call.1} parent=5 // pred_fallthru
        _
    $region6: #{tpu_custom_call.1} parent=1 // loop_footer
      %s22 = sadd.s32 1, %s18
    $region7: #{tpu_custom_call.1} parent=1 // loop_footer_branch
      %17 = sbr.rel target = $region3
    $region8: #{tpu_custom_call.1} parent=1 // loop_exit
      _
    %424 = vsyncpa [#allocation3], 1
    %s425 = scalar_lea.sflag [#allocation3], 1
    %426 = vsyncpa %s425, 1
    %427 = vsyncpa [#allocation6], 1
    %428 = vsyncpa [#allocation4], 1
    %s429 = scalar_lea.sflag [#allocation4], 1
    %430 = vsyncpa %s429, 1

</llo_original>
